<compile_context>
chip_gen: v5e
topology: v5e:2x2
jax: 0.10.0
libtpu: 0.0.40
codegen_flags: <defaults>
</compile_context>

<pallas_src>
import functools

import jax
import jax.numpy as jnp
from jax.experimental import pallas as pl
from jax.experimental.pallas import tpu as pltpu


def _gelu_tanh(x):
    # PyTorch F.gelu(x, approximate='tanh'):
    # 0.5*x*(1 + tanh(sqrt(2/pi)*(x + 0.044715*x^3)))
    c = 0.7978845608028654  # sqrt(2/pi)
    return 0.5 * x * (1.0 + jnp.tanh(c * (x + 0.044715 * x * x * x)))


def _cdiv(a, b):
    return -(-a // b)


def _round_up(a, b):
    return _cdiv(a, b) * b


def _hw_tile_defaults():
    """(tm_max, vmem_limit_bytes) chosen per TPU generation (VMEM capacity)."""
    vmem_bytes = None
    try:
        info = pltpu.get_tpu_info()
        v = getattr(info, "vmem_capacity_bytes", None)
        if v:
            vmem_bytes = int(v)
    except Exception:
        vmem_bytes = None
    if vmem_bytes is None:
        # Conservative fallback (assume the smallest known VMEM, v7x-sized).
        vmem_bytes = 64 * 1024 * 1024
    if vmem_bytes >= 96 * 1024 * 1024:
        # v5e / v6e: 128 MiB VMEM -> big row tiles, generous scoped limit.
        return 1024, 100 * 1024 * 1024
    # v7x-class: 64 MiB VMEM per TensorCore -> tm=512 clears the roofline
    # threshold (~310 FLOP/byte) while the working set stays well under 48 MiB.
    return 512, 48 * 1024 * 1024


# --------------------------------------------------------------------------
# One-time (model-load) weight preparation.
# --------------------------------------------------------------------------
def prepare_gemma_mlp_weights(w_gate, w_up, w_down, *, ti=512,
                              compute_dtype=jnp.bfloat16):
    """Pre-tile GemmaMLP weights into slab-contiguous kernel layouts.

    w_gate, w_up: PyTorch nn.Linear weights, shape (I, H)   ((out, in))
    w_down:       PyTorch nn.Linear weight,  shape (H, I)
    Returns:
      wgu_slabs: (I//ti, H, 2*ti)  fused gate|up, slab-contiguous, (in, out)
      wd_slabs:  (I//ti, ti, H)    down_proj, slab-contiguous, (in, out)
    """
    I, H = w_gate.shape
    assert w_up.shape == (I, H), w_up.shape
    assert w_down.shape == (H, I), w_down.shape
    ti = min(ti, I)
    assert I % ti == 0, "intermediate_size must be divisible by the I tile"
    assert ti % 128 == 0, "I tile must be a multiple of 128 lanes"
    nI = I // ti
    dt = jnp.dtype(compute_dtype) if compute_dtype is not None else w_gate.dtype

    wg_t = w_gate.T.astype(dt)                       # (H, I)
    wu_t = w_up.T.astype(dt)                         # (H, I)
    wg_s = wg_t.reshape(H, nI, ti).transpose(1, 0, 2)  # (nI, H, ti)
    wu_s = wu_t.reshape(H, nI, ti).transpose(1, 0, 2)  # (nI, H, ti)
    wgu_slabs = jnp.concatenate([wg_s, wu_s], axis=-1)  # (nI, H, 2*ti)

    wd_t = w_down.T.astype(dt)                       # (I, H)
    wd_slabs = wd_t.reshape(nI, ti, H)                # (nI, ti, H)
    return wgu_slabs, wd_slabs


# --------------------------------------------------------------------------
# Kernel.
# --------------------------------------------------------------------------
def gemma_mlp_kernel(x_ref, wgu_ref, wd_ref, o_ref, acc_ref, *, ti):
    # x_ref:   (tm, H)     row tile of flattened activations (I-invariant)
    # wgu_ref: (H, 2*ti)   fused gate|up weight slab for reduction step i
    # wd_ref:  (ti, H)     down_proj weight slab for reduction step i
    # o_ref:   (tm, H)     output tile (written on the last I step)
    # acc_ref: (tm, H)     f32 accumulator scratch, carried across the I axis
    i = pl.program_id(1)

    @pl.when(i == 0)
    def _():
        acc_ref[...] = jnp.zeros_like(acc_ref)

    x = x_ref[...]
    # Single fused matmul for gate and up (halves MXU drain / DMA descriptors).
    gu = jnp.dot(x, wgu_ref[...], preferred_element_type=jnp.float32)
    gate = gu[:, :ti]
    up = gu[:, ti:]
    # gelu/mul in f32 (EUP tanh hides under the MXU once it is saturated).
    h = _gelu_tanh(gate) * up
    acc_ref[...] += jnp.dot(h.astype(wd_ref.dtype), wd_ref[...],
                            preferred_element_type=jnp.float32)

    @pl.when(i == pl.num_programs(1) - 1)
    def _():
        o_ref[...] = acc_ref[...].astype(o_ref.dtype)


@functools.partial(jax.jit,
                   static_argnames=("tm", "vmem_limit_bytes", "out_dtype"))
def _gemma_mlp_impl(x, wgu_slabs, wd_slabs, *, tm, vmem_limit_bytes, out_dtype):
    B, S, H = x.shape
    nI, Hw, two_ti = wgu_slabs.shape
    assert Hw == H, (Hw, H)
    ti = two_ti // 2
    assert wd_slabs.shape == (nI, ti, H), wd_slabs.shape
    compute_dtype = wgu_slabs.dtype

    M = B * S
    M_pad = _round_up(M, tm)

    x2 = x.astype(compute_dtype).reshape(M, H)
    if M_pad != M:
        # Padded rows are zero -> contribute zero to down_proj, sliced off below.
        x2 = jnp.pad(x2, ((0, M_pad - M), (0, 0)))

    grid = (M_pad // tm, nI)

    out = pl.pallas_call(
        functools.partial(gemma_mlp_kernel, ti=ti),
        out_shape=jax.ShapeDtypeStruct((M_pad, H), out_dtype),
        grid=grid,
        in_specs=[
            # x tile: constant along the I axis -> fetched once per row block.
            pl.BlockSpec((tm, H), lambda m, i: (m, 0)),
            # Fused gate|up slab: contiguous (H, 2*ti) DMA per reduction step.
            pl.BlockSpec((None, H, two_ti), lambda m, i: (i, 0, 0)),
            # down_proj slab: contiguous (ti, H) DMA per reduction step.
            pl.BlockSpec((None, ti, H), lambda m, i: (i, 0, 0)),
        ],
        out_specs=pl.BlockSpec((tm, H), lambda m, i: (m, 0)),
        scratch_shapes=[pltpu.VMEM((tm, H), jnp.float32)],
        compiler_params=pltpu.CompilerParams(
            # M axis sharded across TensorCores (megacore); I axis is the
            # reduction (accumulator carried) -> arbitrary.
            dimension_semantics=("parallel", "arbitrary"),
            vmem_limit_bytes=vmem_limit_bytes,
        ),
    )(x2, wgu_slabs, wd_slabs)

    if M_pad != M:
        out = out[:M]
    return out.reshape(B, S, H)


def gemma_mlp(x, wgu_slabs, wd_slabs, *, tm=None, out_dtype=None):
    """GemmaMLP forward.

    x:         (B, S, H) activations.
    wgu_slabs: (I//ti, H, 2*ti) fused gate|up weights from
               prepare_gemma_mlp_weights().
    wd_slabs:  (I//ti, ti, H) down_proj weights from prepare_gemma_mlp_weights().
    tm:        optional row-tile override; default is generation-aware.
    """
    B, S, H = x.shape
    M = B * S
    compute_dtype = wgu_slabs.dtype
    # Sublane granule: 8 for 32-bit dtypes, 16 for packed 16-bit dtypes.
    row_gran = 8 if jnp.dtype(compute_dtype).itemsize >= 4 else 16

    tm_max, vmem_limit = _hw_tile_defaults()
    if tm is not None:
        tm_max = tm
    # Split M into the fewest <= tm_max row blocks, sized to minimize padding
    # (e.g. M=300, tm_max=512 -> tm=304, not 512 padded rows).
    n_blocks = max(1, _cdiv(M, tm_max))
    tm_eff = _round_up(_cdiv(M, n_blocks), row_gran)

    out_dtype = jnp.dtype(out_dtype) if out_dtype is not None else x.dtype
    return _gemma_mlp_impl(x, wgu_slabs, wd_slabs, tm=tm_eff,
                           vmem_limit_bytes=vmem_limit, out_dtype=out_dtype)


def gemma_mlp_ref(x, w_gate, w_up, w_down):
    """Pure-JAX reference using PyTorch-layout (out, in) weights."""
    gate = jnp.einsum("bsh,ih->bsi", x, w_gate)
    up = jnp.einsum("bsh,ih->bsi", x, w_up)
    h = _gelu_tanh(gate) * up
    return jnp.einsum("bsi,hi->bsh", h, w_down)


if __name__ == "__main__":
    # Small config consistent with GemmaMLP: hidden_size=128, intermediate=256.
    B, S, H, I = 2, 8, 128, 256

    key = jax.random.PRNGKey(0)
    kx, kg, ku, kd = jax.random.split(key, 4)
    x = jax.random.normal(kx, (B, S, H), dtype=jnp.float32)
    # nn.Linear(in, out, bias=False) weights have shape (out, in).
    w_gate = jax.random.normal(kg, (I, H), dtype=jnp.float32) * 0.05
    w_up = jax.random.normal(ku, (I, H), dtype=jnp.float32) * 0.05
    w_down = jax.random.normal(kd, (H, I), dtype=jnp.float32) * 0.05

    ref = gemma_mlp_ref(x, w_gate, w_up, w_down)

    # f32 path (tight numerics check).
    wgu_f32, wd_f32 = prepare_gemma_mlp_weights(
        w_gate, w_up, w_down, compute_dtype=jnp.float32)
    out = jax.block_until_ready(gemma_mlp(x, wgu_f32, wd_f32))
    assert out.shape == (B, S, H)
    assert jnp.allclose(out, ref, atol=1e-4, rtol=1e-4)

    # Default production path: bf16 MXU matmuls with f32 accumulation
    # (how it runs at real Gemma sizes); looser tolerance vs f32 reference.
    wgu_bf16, wd_bf16 = prepare_gemma_mlp_weights(w_gate, w_up, w_down)
    out_bf16 = jax.block_until_ready(gemma_mlp(x, wgu_bf16, wd_bf16))
    assert out_bf16.shape == (B, S, H)
    assert jnp.allclose(out_bf16, ref, atol=1e-1, rtol=1e-1)

    print("KERNEL_OK")
</pallas_src>

<mosaic_0001>
module attributes {stable_mosaic.version = 11 : i64} {
  func.func @gemma_mlp_kernel(%arg0: i32, %arg1: i32, %arg2: memref<16x128xf32, #tpu.memory_space<vmem>>, %arg3: memref<1x128x512xf32, #tpu.memory_space<vmem>>, %arg4: memref<1x256x128xf32, #tpu.memory_space<vmem>>, %arg5: memref<16x128xf32, #tpu.memory_space<vmem>>, %arg6: memref<16x128xf32, #tpu.memory_space<vmem>>) attributes {dimension_semantics = [#tpu.dimension_semantics<parallel>, #tpu.dimension_semantics<arbitrary>], iteration_bounds = array<i64: 1, 1>, scalar_prefetch = 0 : i64, scratch_operands = 1 : i64, tpu.core_type = #tpu.core_type<tc>, window_params = [{transform_indices = @transform_0, window_bounds = array<i64: 16, 128>}, {transform_indices = @transform_1, window_bounds = array<i64: 1, 128, 512>}, {transform_indices = @transform_2, window_bounds = array<i64: 1, 256, 128>}, {transform_indices = @transform_3, window_bounds = array<i64: 16, 128>}]} {
    %c0_i32 = arith.constant 0 : i32
    %0 = arith.cmpi eq, %arg1, %c0_i32 : i32
    %1 = arith.extui %0 : i1 to i32
    %c0_i32_0 = arith.constant 0 : i32
    %2 = arith.cmpi ne, %1, %c0_i32_0 : i32
    scf.if %2 {
      %cst_19 = arith.constant 0.000000e+00 : f32
      %32 = vector.broadcast %cst_19 : f32 to vector<16x128xf32>
      %c0_20 = arith.constant 0 : index
      %c0_21 = arith.constant 0 : index
      %33 = vector.load %arg6[%c0_20, %c0_21] : memref<16x128xf32, #tpu.memory_space<vmem>>, vector<16x128xf32>
      tpu.vector_store %arg6[%c0_20, %c0_21], %32 {strides = array<i32>} : memref<16x128xf32, #tpu.memory_space<vmem>>, vector<16x128xf32>,
    } else {
    }
    %c0 = arith.constant 0 : index
    %c0_1 = arith.constant 0 : index
    %3 = vector.load %arg2[%c0, %c0_1] : memref<16x128xf32, #tpu.memory_space<vmem>>, vector<16x128xf32>
    %c0_2 = arith.constant 0 : index
    %c0_3 = arith.constant 0 : index
    %c0_4 = arith.constant 0 : index
    %4 = vector.load %arg3[%c0_2, %c0_3, %c0_4] : memref<1x128x512xf32, #tpu.memory_space<vmem>>, vector<1x128x512xf32>
    %5 = vector.shape_cast %4 : vector<1x128x512xf32> to vector<128x512xf32>
    %cst = arith.constant dense<0.000000e+00> : vector<16x512xf32>
    %6 = tpu.matmul %3, %5, %cst {dimension_numbers = #tpu.dot_dimension_numbers<[1], [0], [0], [1], [0, 0, 1, 1], [], []>} : vector<16x128xf32>, vector<128x512xf32>, vector<16x512xf32> -> vector<16x512xf32>
    %7 = vector.extract_strided_slice %6 {offsets = [0, 0], sizes = [16, 256], strides = [1, 1]} : vector<16x512xf32> to vector<16x256xf32>
    %8 = vector.extract_strided_slice %6 {offsets = [0, 256], sizes = [16, 256], strides = [1, 1]} : vector<16x512xf32> to vector<16x256xf32>
    %cst_5 = arith.constant 5.000000e-01 : f32
    %9 = vector.broadcast %cst_5 : f32 to vector<16x256xf32>
    %10 = arith.mulf %9, %7 : vector<16x256xf32>
    %cst_6 = arith.constant 4.471500e-02 : f32
    %11 = vector.broadcast %cst_6 : f32 to vector<16x256xf32>
    %12 = arith.mulf %11, %7 : vector<16x256xf32>
    %13 = arith.mulf %12, %7 : vector<16x256xf32>
    %14 = arith.mulf %13, %7 : vector<16x256xf32>
    %15 = arith.addf %7, %14 : vector<16x256xf32>
    %cst_7 = arith.constant 0.797884583 : f32
    %16 = vector.broadcast %cst_7 : f32 to vector<16x256xf32>
    %17 = arith.mulf %16, %15 : vector<16x256xf32>
    %18 = math.tanh %17 : vector<16x256xf32>
    %cst_8 = arith.constant 1.000000e+00 : f32
    %19 = vector.broadcast %cst_8 : f32 to vector<16x256xf32>
    %20 = arith.addf %19, %18 : vector<16x256xf32>
    %21 = arith.mulf %10, %20 : vector<16x256xf32>
    %22 = arith.mulf %21, %8 : vector<16x256xf32>
    %c0_9 = arith.constant 0 : index
    %c0_10 = arith.constant 0 : index
    %23 = vector.load %arg6[%c0_9, %c0_10] : memref<16x128xf32, #tpu.memory_space<vmem>>, vector<16x128xf32>
    %c0_11 = arith.constant 0 : index
    %c0_12 = arith.constant 0 : index
    %c0_13 = arith.constant 0 : index
    %24 = vector.load %arg4[%c0_11, %c0_12, %c0_13] : memref<1x256x128xf32, #tpu.memory_space<vmem>>, vector<1x256x128xf32>
    %25 = vector.shape_cast %24 : vector<1x256x128xf32> to vector<256x128xf32>
    %cst_14 = arith.constant dense<0.000000e+00> : vector<16x128xf32>
    %26 = tpu.matmul %22, %25, %cst_14 {dimension_numbers = #tpu.dot_dimension_numbers<[1], [0], [0], [1], [0, 0, 1, 1], [], []>} : vector<16x256xf32>, vector<256x128xf32>, vector<16x128xf32> -> vector<16x128xf32>
    %27 = arith.addf %23, %26 : vector<16x128xf32>
    %c0_15 = arith.constant 0 : index
    %c0_16 = arith.constant 0 : index
    %28 = vector.load %arg6[%c0_15, %c0_16] : memref<16x128xf32, #tpu.memory_space<vmem>>, vector<16x128xf32>
    tpu.vector_store %arg6[%c0_15, %c0_16], %27 {strides = array<i32>} : memref<16x128xf32, #tpu.memory_space<vmem>>, vector<16x128xf32>,
    %c0_i32_17 = arith.constant 0 : i32
    %29 = arith.cmpi eq, %arg1, %c0_i32_17 : i32
    %30 = arith.extui %29 : i1 to i32
    %c0_i32_18 = arith.constant 0 : i32
    %31 = arith.cmpi ne, %30, %c0_i32_18 : i32
    scf.if %31 {
      %c0_19 = arith.constant 0 : index
      %c0_20 = arith.constant 0 : index
      %32 = vector.load %arg6[%c0_19, %c0_20] : memref<16x128xf32, #tpu.memory_space<vmem>>, vector<16x128xf32>
      %c0_21 = arith.constant 0 : index
      %c0_22 = arith.constant 0 : index
      %33 = vector.load %arg5[%c0_21, %c0_22] : memref<16x128xf32, #tpu.memory_space<vmem>>, vector<16x128xf32>
      tpu.vector_store %arg5[%c0_21, %c0_22], %32 {strides = array<i32>} : memref<16x128xf32, #tpu.memory_space<vmem>>, vector<16x128xf32>,
    } else {
    }
    return
  }
  func.func @transform_0(%arg0: i32, %arg1: i32) -> (i32, i32) {
    %c0_i32 = arith.constant 0 : i32
    %c0_i32_0 = arith.constant 0 : i32
    return %arg0, %c0_i32 : i32, i32
  }
  func.func @transform_1(%arg0: i32, %arg1: i32) -> (i32, i32, i32) {
    %c0_i32 = arith.constant 0 : i32
    %c0_i32_0 = arith.constant 0 : i32
    %c0_i32_1 = arith.constant 0 : i32
    return %arg1, %c0_i32, %c0_i32_0 : i32, i32, i32
  }
  func.func @transform_2(%arg0: i32, %arg1: i32) -> (i32, i32, i32) {
    %c0_i32 = arith.constant 0 : i32
    %c0_i32_0 = arith.constant 0 : i32
    %c0_i32_1 = arith.constant 0 : i32
    return %arg1, %c0_i32, %c0_i32_0 : i32, i32, i32
  }
  func.func @transform_3(%arg0: i32, %arg1: i32) -> (i32, i32) {
    %c0_i32 = arith.constant 0 : i32
    %c0_i32_0 = arith.constant 0 : i32
    return %arg0, %c0_i32 : i32, i32
  }
}

</mosaic_0001>

<llo_original>
// kernel: _gemma_mlp_impl.1
$region0: #{_gemma_mlp_impl.1}
  #allocation0 [shape = 'u32[]', space=smem, size = 0x4, offset = 0x4, fixed_abs, tag = 'smem constant byte address 0x4 - core index']
  #allocation1 [shape = 'u32[72,128]{1,0:T(1,128)}', space=vmem, size = 0x9000, scoped, tag = 'internal scratch']
  #allocation2 [shape = 'f32[16,128]{1,0:T(8,128)}', space=vmem, size = 0x2000, scoped, tag = 'scratch operand']
  %s0 = inlined_call_operand.hbm [shape: f32[16,128], index: 0, kind: input, shape index: {}]
  %s1 = inlined_call_operand.hbm [shape: f32[1,128,512], index: 1, kind: input, shape index: {}]
  %s2 = inlined_call_operand.hbm [shape: f32[1,256,128], index: 2, kind: input, shape index: {}]
  %s3 = inlined_call_operand.hbm [shape: f32[16,128], index: 3, kind: output, shape index: {}]
  %s4 = sld [smem:[#allocation0]]
  $region42: #{_gemma_mlp_impl.1} parent=0
    _
  %s6 = ssub.s32 1, %s4
  %s7 = scalar_select 0, %s6, %s4
  $region1: #{_gemma_mlp_impl.1} parent=0
    #allocation3 [shape = 'u8[8192]{0}', space=vmem, size = 0x2000, scoped, tag = 'input window, operand 0, single buffered']
    #allocation4 [shape = 's32[1]{0}', space=sflag, size = 0x4, scoped, tag = 'scoped memory for _gemma_mlp_impl.1']
    #allocation5 [shape = 's32[1]{0}', space=sflag, size = 0x4, scoped, tag = 'scoped memory for _gemma_mlp_impl.1']
    #allocation6 [shape = 'u8[262144]{0}', space=vmem, size = 0x40000, scoped, tag = 'input window, operand 1, single buffered']
    #allocation7 [shape = 's32[1]{0}', space=sflag, size = 0x4, scoped, tag = 'scoped memory for _gemma_mlp_impl.1']
    #allocation8 [shape = 'u8[131072]{0}', space=vmem, size = 0x20000, scoped, tag = 'input window, operand 2, single buffered']
    #allocation9 [shape = 'u8[8192]{0}', space=vmem, size = 0x2000, scoped, tag = 'output window, operand 0, single buffered']
    %8 = vsyncpa [#allocation4], 0
    %9 = vsyncpa [#allocation7], 0
    %10 = vsyncpa [#allocation5], 0
    // Predicated region
    $region2: #{_gemma_mlp_impl.1} parent=1 // pred_check
      _
    $region3: #{_gemma_mlp_impl.1} parent=1 // pred_check_branch
      %12 = sbr.rel (0) target = $region5
    $region4: #{_gemma_mlp_impl.1} parent=1 // pred_region
      %14 = vsyncadd [#allocation4], 0
      %s15 = sshll.u32 %s0, 4
      %s16 = int_to_ptr.hbm [resolvable:$true] %s15
      %s17 = sshll.u32 [#allocation3], 4
      %s18 = int_to_ptr.vmem [resolvable:$true] %s17
      %23 = dma.hbm_to_vmem [thread:$0]  %s16, 256, %s18, [#allocation4], 128, 128, 8
    $region5: #{_gemma_mlp_impl.1} parent=1 // pred_fallthru
      _
    // Predicated region
    $region6: #{_gemma_mlp_impl.1} parent=1 // pred_check
      _
    $region7: #{_gemma_mlp_impl.1} parent=1 // pred_check_branch
      %25 = sbr.rel (0) target = $region9
    $region8: #{_gemma_mlp_impl.1} parent=1 // pred_region
      %27 = vsyncadd [#allocation7], 0
      %s28 = sshll.u32 %s1, 4
      %s29 = int_to_ptr.hbm [resolvable:$true] %s28
      %s30 = sshll.u32 [#allocation6], 4
      %s31 = int_to_ptr.vmem [resolvable:$true] %s30
      %36 = dma.hbm_to_vmem [thread:$0]  %s29, 8192, %s31, [#allocation7], 512, 512, 32
    $region9: #{_gemma_mlp_impl.1} parent=1 // pred_fallthru
      _
    // Predicated region
    $region10: #{_gemma_mlp_impl.1} parent=1 // pred_check
      _
    $region11: #{_gemma_mlp_impl.1} parent=1 // pred_check_branch
      %38 = sbr.rel (0) target = $region13
    $region12: #{_gemma_mlp_impl.1} parent=1 // pred_region
      %40 = vsyncadd [#allocation7], 0
      %s41 = sshll.u32 %s2, 4
      %s42 = int_to_ptr.hbm [resolvable:$true] %s41
      %s43 = sshll.u32 [#allocation8], 4
      %s44 = int_to_ptr.vmem [resolvable:$true] %s43
      %49 = dma.hbm_to_vmem [thread:$0]  %s42, 4096, %s44, [#allocation7], 128, 128, 8
    $region13: #{_gemma_mlp_impl.1} parent=1 // pred_fallthru
      _
    // Predicated region
    $region14: #{_gemma_mlp_impl.1} parent=1 // pred_check
      _
    $region15: #{_gemma_mlp_impl.1} parent=1 // pred_check_branch
      %51 = sbr.rel (0) target = $region17
    $region16: #{_gemma_mlp_impl.1} parent=1 // pred_region
      %53 = dma.done [#allocation4], 256
    $region17: #{_gemma_mlp_impl.1} parent=1 // pred_fallthru
      _
    // Predicated region
    $region18: #{_gemma_mlp_impl.1} parent=1 // pred_check
      _
    $region19: #{_gemma_mlp_impl.1} parent=1 // pred_check_branch
      %55 = sbr.rel (0) target = $region21
    $region20: #{_gemma_mlp_impl.1} parent=1 // pred_region
      %57 = dma.done [#allocation7], 8192
    $region21: #{_gemma_mlp_impl.1} parent=1 // pred_fallthru
      _
    // Predicated region
    $region22: #{_gemma_mlp_impl.1} parent=1 // pred_check
      _
    $region23: #{_gemma_mlp_impl.1} parent=1 // pred_check_branch
      %59 = sbr.rel (0) target = $region25
    $region24: #{_gemma_mlp_impl.1} parent=1 // pred_region
      %61 = dma.done [#allocation7], 4096
    $region25: #{_gemma_mlp_impl.1} parent=1 // pred_fallthru
      _
    %p62 = scmp.eq.s32.totalorder 0, 0
    // Predicated region
    $region26: #{_gemma_mlp_impl.1} parent=1 // pred_check
      %p63 = pneg %p62
    $region27: #{_gemma_mlp_impl.1} parent=1 // pred_check_branch
      %65 = sbr.rel (%p63) target = $region29
    $region28: #{_gemma_mlp_impl.1} parent=1 // pred_region
      %66 = vst [vmem:[#allocation2] sm:$0xff] 0.0
      %67 = vst [vmem:[#allocation2 + $0x8] sm:$0xff] 0.0
    $region29: #{_gemma_mlp_impl.1} parent=1 // pred_fallthru
      _
    %v68 = vld [vmem:[#allocation3] sm:$0xff]
    %v69 = vld [vmem:[#allocation3 + $0x8] sm:$0xff]
    %v70 = vld [vmem:[#allocation6] sm:$0xff]
    %v71 = vld [vmem:[#allocation6 + $0x8] sm:$0xff]
    %v72 = vld [vmem:[#allocation6 + $0x10] sm:$0xff]
    %v73 = vld [vmem:[#allocation6 + $0x18] sm:$0xff]
    %v74 = vld [vmem:[#allocation6 + $0x20] sm:$0xff]
    %v75 = vld [vmem:[#allocation6 + $0x28] sm:$0xff]
    %v76 = vld [vmem:[#allocation6 + $0x30] sm:$0xff]
    %v77 = vld [vmem:[#allocation6 + $0x38] sm:$0xff]
    %v78 = vld [vmem:[#allocation6 + $0x40] sm:$0xff]
    %v79 = vld [vmem:[#allocation6 + $0x48] sm:$0xff]
    %v80 = vld [vmem:[#allocation6 + $0x50] sm:$0xff]
    %v81 = vld [vmem:[#allocation6 + $0x58] sm:$0xff]
    %v82 = vld [vmem:[#allocation6 + $0x60] sm:$0xff]
    %v83 = vld [vmem:[#allocation6 + $0x68] sm:$0xff]
    %v84 = vld [vmem:[#allocation6 + $0x70] sm:$0xff]
    %v85 = vld [vmem:[#allocation6 + $0x78] sm:$0xff]
    %v86 = vld [vmem:[#allocation6 + $0x80] sm:$0xff]
    %v87 = vld [vmem:[#allocation6 + $0x88] sm:$0xff]
    %v88 = vld [vmem:[#allocation6 + $0x90] sm:$0xff]
    %v89 = vld [vmem:[#allocation6 + $0x98] sm:$0xff]
    %v90 = vld [vmem:[#allocation6 + $0xa0] sm:$0xff]
    %v91 = vld [vmem:[#allocation6 + $0xa8] sm:$0xff]
    %v92 = vld [vmem:[#allocation6 + $0xb0] sm:$0xff]
    %v93 = vld [vmem:[#allocation6 + $0xb8] sm:$0xff]
    %v94 = vld [vmem:[#allocation6 + $0xc0] sm:$0xff]
    %v95 = vld [vmem:[#allocation6 + $0xc8] sm:$0xff]
    %v96 = vld [vmem:[#allocation6 + $0xd0] sm:$0xff]
    %v97 = vld [vmem:[#allocation6 + $0xd8] sm:$0xff]
    %v98 = vld [vmem:[#allocation6 + $0xe0] sm:$0xff]
    %v99 = vld [vmem:[#allocation6 + $0xe8] sm:$0xff]
    %v100 = vld [vmem:[#allocation6 + $0xf0] sm:$0xff]
    %v101 = vld [vmem:[#allocation6 + $0xf8] sm:$0xff]
    %v102 = vld [vmem:[#allocation6 + $0x100] sm:$0xff]
    %v103 = vld [vmem:[#allocation6 + $0x108] sm:$0xff]
    %v104 = vld [vmem:[#allocation6 + $0x110] sm:$0xff]
    %v105 = vld [vmem:[#allocation6 + $0x118] sm:$0xff]
    %v106 = vld [vmem:[#allocation6 + $0x120] sm:$0xff]
    %v107 = vld [vmem:[#allocation6 + $0x128] sm:$0xff]
    %v108 = vld [vmem:[#allocation6 + $0x130] sm:$0xff]
    %v109 = vld [vmem:[#allocation6 + $0x138] sm:$0xff]
    %v110 = vld [vmem:[#allocation6 + $0x140] sm:$0xff]
    %v111 = vld [vmem:[#allocation6 + $0x148] sm:$0xff]
    %v112 = vld [vmem:[#allocation6 + $0x150] sm:$0xff]
    %v113 = vld [vmem:[#allocation6 + $0x158] sm:$0xff]
    %v114 = vld [vmem:[#allocation6 + $0x160] sm:$0xff]
    %v115 = vld [vmem:[#allocation6 + $0x168] sm:$0xff]
    %v116 = vld [vmem:[#allocation6 + $0x170] sm:$0xff]
    %v117 = vld [vmem:[#allocation6 + $0x178] sm:$0xff]
    %v118 = vld [vmem:[#allocation6 + $0x180] sm:$0xff]
    %v119 = vld [vmem:[#allocation6 + $0x188] sm:$0xff]
    %v120 = vld [vmem:[#allocation6 + $0x190] sm:$0xff]
    %v121 = vld [vmem:[#allocation6 + $0x198] sm:$0xff]
    %v122 = vld [vmem:[#allocation6 + $0x1a0] sm:$0xff]
    %v123 = vld [vmem:[#allocation6 + $0x1a8] sm:$0xff]
    %v124 = vld [vmem:[#allocation6 + $0x1b0] sm:$0xff]
    %v125 = vld [vmem:[#allocation6 + $0x1b8] sm:$0xff]
    %v126 = vld [vmem:[#allocation6 + $0x1c0] sm:$0xff]
    %v127 = vld [vmem:[#allocation6 + $0x1c8] sm:$0xff]
    %v128 = vld [vmem:[#allocation6 + $0x1d0] sm:$0xff]
    %v129 = vld [vmem:[#allocation6 + $0x1d8] sm:$0xff]
    %v130 = vld [vmem:[#allocation6 + $0x1e0] sm:$0xff]
    %v131 = vld [vmem:[#allocation6 + $0x1e8] sm:$0xff]
    %v132 = vld [vmem:[#allocation6 + $0x1f0] sm:$0xff]
    %v133 = vld [vmem:[#allocation6 + $0x1f8] sm:$0xff]
    %134 = vmatpush.msra.mxu0 %v130
    %135 = vmatpush.msra.mxu0 %v126
    %136 = vmatpush.msra.mxu0 %v122
    %137 = vmatpush.msra.mxu0 %v118
    %138 = vmatpush.msra.mxu0 %v114
    %139 = vmatpush.msra.mxu0 %v110
    %140 = vmatpush.msra.mxu0 %v106
    %141 = vmatpush.msra.mxu0 %v102
    %142 = vmatpush.msra.mxu0 %v98
    %143 = vmatpush.msra.mxu0 %v94
    %144 = vmatpush.msra.mxu0 %v90
    %145 = vmatpush.msra.mxu0 %v86
    %146 = vmatpush.msra.mxu0 %v82
    %147 = vmatpush.msra.mxu0 %v78
    %148 = vmatpush.msra.mxu0 %v74
    %149 = vmatpush.msra.mxu0 %v70
    %150 = vmatmul.f32.gmra.mxu0 %v68
    %v151 = vpop.f32.mrf.mxu0
    %v152 = vadd.f32 0.0, %v151
    %153 = vmatmul.f32.gmra.mxu0 %v69
    %v154 = vpop.f32.mrf.mxu0
    %v155 = vadd.f32 0.0, %v154
    %156 = vdwg.mxu0
    %157 = vmatpush.msra.mxu0 %v131
    %158 = vmatpush.msra.mxu0 %v127
    %159 = vmatpush.msra.mxu0 %v123
    %160 = vmatpush.msra.mxu0 %v119
    %161 = vmatpush.msra.mxu0 %v115
    %162 = vmatpush.msra.mxu0 %v111
    %163 = vmatpush.msra.mxu0 %v107
    %164 = vmatpush.msra.mxu0 %v103
    %165 = vmatpush.msra.mxu0 %v99
    %166 = vmatpush.msra.mxu0 %v95
    %167 = vmatpush.msra.mxu0 %v91
    %168 = vmatpush.msra.mxu0 %v87
    %169 = vmatpush.msra.mxu0 %v83
    %170 = vmatpush.msra.mxu0 %v79
    %171 = vmatpush.msra.mxu0 %v75
    %172 = vmatpush.msra.mxu0 %v71
    %173 = vmatmul.f32.gmra.mxu0 %v68
    %v174 = vpop.f32.mrf.mxu0
    %v175 = vadd.f32 0.0, %v174
    %176 = vmatmul.f32.gmra.mxu0 %v69
    %v177 = vpop.f32.mrf.mxu0
    %v178 = vadd.f32 0.0, %v177
    %179 = vdwg.mxu0
    %180 = vmatpush.msra.mxu0 %v132
    %181 = vmatpush.msra.mxu0 %v128
    %182 = vmatpush.msra.mxu0 %v124
    %183 = vmatpush.msra.mxu0 %v120
    %184 = vmatpush.msra.mxu0 %v116
    %185 = vmatpush.msra.mxu0 %v112
    %186 = vmatpush.msra.mxu0 %v108
    %187 = vmatpush.msra.mxu0 %v104
    %188 = vmatpush.msra.mxu0 %v100
    %189 = vmatpush.msra.mxu0 %v96
    %190 = vmatpush.msra.mxu0 %v92
    %191 = vmatpush.msra.mxu0 %v88
    %192 = vmatpush.msra.mxu0 %v84
    %193 = vmatpush.msra.mxu0 %v80
    %194 = vmatpush.msra.mxu0 %v76
    %195 = vmatpush.msra.mxu0 %v72
    %196 = vmatmul.f32.gmra.mxu0 %v68
    %v197 = vpop.f32.mrf.mxu0
    %v198 = vadd.f32 0.0, %v197
    %199 = vmatmul.f32.gmra.mxu0 %v69
    %v200 = vpop.f32.mrf.mxu0
    %v201 = vadd.f32 0.0, %v200
    %202 = vdwg.mxu0
    %203 = vmatpush.msra.mxu0 %v133
    %204 = vmatpush.msra.mxu0 %v129
    %205 = vmatpush.msra.mxu0 %v125
    %206 = vmatpush.msra.mxu0 %v121
    %207 = vmatpush.msra.mxu0 %v117
    %208 = vmatpush.msra.mxu0 %v113
    %209 = vmatpush.msra.mxu0 %v109
    %210 = vmatpush.msra.mxu0 %v105
    %211 = vmatpush.msra.mxu0 %v101
    %212 = vmatpush.msra.mxu0 %v97
    %213 = vmatpush.msra.mxu0 %v93
    %214 = vmatpush.msra.mxu0 %v89
    %215 = vmatpush.msra.mxu0 %v85
    %216 = vmatpush.msra.mxu0 %v81
    %217 = vmatpush.msra.mxu0 %v77
    %218 = vmatpush.msra.mxu0 %v73
    %219 = vmatmul.f32.gmra.mxu0 %v68
    %v220 = vpop.f32.mrf.mxu0
    %v221 = vadd.f32 0.0, %v220
    %222 = vmatmul.f32.gmra.mxu0 %v69
    %v223 = vpop.f32.mrf.mxu0
    %v224 = vadd.f32 0.0, %v223
    %225 = vdwg.mxu0
    %v226 = vmul.f32 %v152, 0.5
    %v227 = vmul.f32 %v175, 0.5
    %v228 = vmul.f32 %v155, 0.5
    %v229 = vmul.f32 %v178, 0.5
    %v230 = vmul.f32 %v152, 0.044715
    %v231 = vmul.f32 %v175, 0.044715
    %v232 = vmul.f32 %v155, 0.044715
    %v233 = vmul.f32 %v178, 0.044715
    %v234 = vmul.f32 %v230, %v152
    %v235 = vmul.f32 %v231, %v175
    %v236 = vmul.f32 %v232, %v155
    %v237 = vmul.f32 %v233, %v178
    %v238 = vmul.f32 %v234, %v152
    %v239 = vmul.f32 %v235, %v175
    %v240 = vmul.f32 %v236, %v155
    %v241 = vmul.f32 %v237, %v178
    %v242 = vadd.f32 %v152, %v238
    %v243 = vadd.f32 %v175, %v239
    %v244 = vadd.f32 %v155, %v240
    %v245 = vadd.f32 %v178, %v241
    %v246 = vmul.f32 %v242, 0.7978846
    %v247 = vmul.f32 %v243, 0.7978846
    %v248 = vmul.f32 %v244, 0.7978846
    %v249 = vmul.f32 %v245, 0.7978846
    %v250 = vtanh.pop %v246
    %v251 = vtanh.pop %v247
    %v252 = vtanh.pop %v248
    %v253 = vtanh.pop %v249
    %v254 = vadd.f32 %v250, 1.0
    %v255 = vadd.f32 %v251, 1.0
    %v256 = vadd.f32 %v252, 1.0
    %v257 = vadd.f32 %v253, 1.0
    %v258 = vmul.f32 %v226, %v254
    %v259 = vmul.f32 %v227, %v255
    %v260 = vmul.f32 %v228, %v256
    %v261 = vmul.f32 %v229, %v257
    %v262 = vmul.f32 %v258, %v198
    %v263 = vmul.f32 %v259, %v221
    %v264 = vmul.f32 %v260, %v201
    %v265 = vmul.f32 %v261, %v224
    %v266 = vld [vmem:[#allocation2] sm:$0xff]
    %v267 = vld [vmem:[#allocation2 + $0x8] sm:$0xff]
    %v268 = vld [vmem:[#allocation8] sm:$0xff]
    %v269 = vld [vmem:[#allocation8 + $0x8] sm:$0xff]
    %v270 = vld [vmem:[#allocation8 + $0x10] sm:$0xff]
    %v271 = vld [vmem:[#allocation8 + $0x18] sm:$0xff]
    %v272 = vld [vmem:[#allocation8 + $0x20] sm:$0xff]
    %v273 = vld [vmem:[#allocation8 + $0x28] sm:$0xff]
    %v274 = vld [vmem:[#allocation8 + $0x30] sm:$0xff]
    %v275 = vld [vmem:[#allocation8 + $0x38] sm:$0xff]
    %v276 = vld [vmem:[#allocation8 + $0x40] sm:$0xff]
    %v277 = vld [vmem:[#allocation8 + $0x48] sm:$0xff]
    %v278 = vld [vmem:[#allocation8 + $0x50] sm:$0xff]
    %v279 = vld [vmem:[#allocation8 + $0x58] sm:$0xff]
    %v280 = vld [vmem:[#allocation8 + $0x60] sm:$0xff]
    %v281 = vld [vmem:[#allocation8 + $0x68] sm:$0xff]
    %v282 = vld [vmem:[#allocation8 + $0x70] sm:$0xff]
    %v283 = vld [vmem:[#allocation8 + $0x78] sm:$0xff]
    %v284 = vld [vmem:[#allocation8 + $0x80] sm:$0xff]
    %v285 = vld [vmem:[#allocation8 + $0x88] sm:$0xff]
    %v286 = vld [vmem:[#allocation8 + $0x90] sm:$0xff]
    %v287 = vld [vmem:[#allocation8 + $0x98] sm:$0xff]
    %v288 = vld [vmem:[#allocation8 + $0xa0] sm:$0xff]
    %v289 = vld [vmem:[#allocation8 + $0xa8] sm:$0xff]
    %v290 = vld [vmem:[#allocation8 + $0xb0] sm:$0xff]
    %v291 = vld [vmem:[#allocation8 + $0xb8] sm:$0xff]
    %v292 = vld [vmem:[#allocation8 + $0xc0] sm:$0xff]
    %v293 = vld [vmem:[#allocation8 + $0xc8] sm:$0xff]
    %v294 = vld [vmem:[#allocation8 + $0xd0] sm:$0xff]
    %v295 = vld [vmem:[#allocation8 + $0xd8] sm:$0xff]
    %v296 = vld [vmem:[#allocation8 + $0xe0] sm:$0xff]
    %v297 = vld [vmem:[#allocation8 + $0xe8] sm:$0xff]
    %v298 = vld [vmem:[#allocation8 + $0xf0] sm:$0xff]
    %v299 = vld [vmem:[#allocation8 + $0xf8] sm:$0xff]
    %300 = vmatpush.msra.mxu0 %v283
    %301 = vmatpush.msra.mxu0 %v282
    %302 = vmatpush.msra.mxu0 %v281
    %303 = vmatpush.msra.mxu0 %v280
    %304 = vmatpush.msra.mxu0 %v279
    %305 = vmatpush.msra.mxu0 %v278
    %306 = vmatpush.msra.mxu0 %v277
    %307 = vmatpush.msra.mxu0 %v276
    %308 = vmatpush.msra.mxu0 %v275
    %309 = vmatpush.msra.mxu0 %v274
    %310 = vmatpush.msra.mxu0 %v273
    %311 = vmatpush.msra.mxu0 %v272
    %312 = vmatpush.msra.mxu0 %v271
    %313 = vmatpush.msra.mxu0 %v270
    %314 = vmatpush.msra.mxu0 %v269
    %315 = vmatpush.msra.mxu0 %v268
    %316 = vmatmul.f32.gmra.mxu0 %v262
    %v317 = vpop.f32.mrf.mxu0
    %v318 = vadd.f32 0.0, %v317
    %319 = vmatmul.f32.gmra.mxu0 %v264
    %v320 = vpop.f32.mrf.mxu0
    %v321 = vadd.f32 0.0, %v320
    %322 = vdwg.mxu0
    %323 = vmatpush.msra.mxu0 %v299
    %324 = vmatpush.msra.mxu0 %v298
    %325 = vmatpush.msra.mxu0 %v297
    %326 = vmatpush.msra.mxu0 %v296
    %327 = vmatpush.msra.mxu0 %v295
    %328 = vmatpush.msra.mxu0 %v294
    %329 = vmatpush.msra.mxu0 %v293
    %330 = vmatpush.msra.mxu0 %v292
    %331 = vmatpush.msra.mxu0 %v291
    %332 = vmatpush.msra.mxu0 %v290
    %333 = vmatpush.msra.mxu0 %v289
    %334 = vmatpush.msra.mxu0 %v288
    %335 = vmatpush.msra.mxu0 %v287
    %336 = vmatpush.msra.mxu0 %v286
    %337 = vmatpush.msra.mxu0 %v285
    %338 = vmatpush.msra.mxu0 %v284
    %339 = vmatmul.f32.gmra.mxu0 %v263
    %v340 = vpop.f32.mrf.mxu0
    %v341 = vadd.f32 %v318, %v340
    %342 = vmatmul.f32.gmra.mxu0 %v265
    %v343 = vpop.f32.mrf.mxu0
    %v344 = vadd.f32 %v321, %v343
    %345 = vdwg.mxu0
    %v346 = vadd.f32 %v266, %v341
    %v347 = vadd.f32 %v267, %v344
    %348 = vst [vmem:[#allocation2] sm:$0xff] %v346
    %349 = vst [vmem:[#allocation2 + $0x8] sm:$0xff] %v347
    // Predicated region
    $region30: #{_gemma_mlp_impl.1} parent=1 // pred_check
      %p350 = pneg %p62
    $region31: #{_gemma_mlp_impl.1} parent=1 // pred_check_branch
      %352 = sbr.rel (%p350) target = $region33
    $region32: #{_gemma_mlp_impl.1} parent=1 // pred_region
      %v353 = vld [vmem:[#allocation2] sm:$0xff]
      %v354 = vld [vmem:[#allocation2 + $0x8] sm:$0xff]
      %355 = vst [vmem:[#allocation9] sm:$0xff] %v353
      %356 = vst [vmem:[#allocation9 + $0x8] sm:$0xff] %v354
    $region33: #{_gemma_mlp_impl.1} parent=1 // pred_fallthru
      _
    // Predicated region
    $region34: #{_gemma_mlp_impl.1} parent=1 // pred_check
      _
    $region35: #{_gemma_mlp_impl.1} parent=1 // pred_check_branch
      %358 = sbr.rel (0) target = $region37
    $region36: #{_gemma_mlp_impl.1} parent=1 // pred_region
      %360 = vsyncadd [#allocation5], 0
      %s361 = sshll.u32 [#allocation9], 4
      %s362 = int_to_ptr.vmem [resolvable:$true] %s361
      %s363 = sshll.u32 %s3, 4
      %s364 = int_to_ptr.hbm [resolvable:$true] %s363
      %369 = dma.vmem_to_hbm [thread:$0]  %s362, 256, %s364, [#allocation5], 128, 128, 8
    $region37: #{_gemma_mlp_impl.1} parent=1 // pred_fallthru
      _
    // Predicated region
    $region38: #{_gemma_mlp_impl.1} parent=1 // pred_check
      _
    $region39: #{_gemma_mlp_impl.1} parent=1 // pred_check_branch
      %371 = sbr.rel (0) target = $region41
    $region40: #{_gemma_mlp_impl.1} parent=1 // pred_region
      %373 = dma.done [#allocation5], 256
    $region41: #{_gemma_mlp_impl.1} parent=1 // pred_fallthru
      _
    %374 = vsyncpa [#allocation4], 1
    %375 = vsyncpa [#allocation7], 1
    %376 = vsyncpa [#allocation5], 1

</llo_original>
